<compile_context>
chip_gen: v7x
topology: tpu7x:2x2x1
jax: 0.10.0
libtpu: 0.0.40
codegen_flags: <defaults>
</compile_context>

<pallas_src>
import functools

import jax
import jax.numpy as jnp
from jax.experimental import pallas as pl
from jax.experimental.pallas import tpu as pltpu


def _round_up(n, m):
    return ((n + m - 1) // m) * m


# ------------------------------ fused kernel --------------------------------
def _fused_actor_critic_kernel(*refs, n_layers, num_outputs):
    """Whole ActorCritic forward (actor & critic stacked) in one kernel.

    ref order (inputs, then output):
      x_ref                        (TB, num_inputs)
      (w_ref, b_ref) * n_layers    fused layers:
          layer 0        : [actor_w0 | critic_w0]            (num_inputs, 2H)
          layers 1..L-2  : block-diag(actor_wi, critic_wi)    (2H, 2H)
          layer  L-1     : block-diag(actor_head, critic_head)(2H, num_outputs+1)
      o_ref                        (TB, num_outputs+1) packed [mu | value]
    """
    x_ref = refs[0]
    o_ref = refs[-1]

    h = x_ref[...]                                   # load x once
    for li in range(n_layers):
        w = refs[1 + 2 * li][...]
        b = refs[2 + 2 * li][...]
        y = jnp.dot(h, w, preferred_element_type=jnp.float32) + b
        if li < n_layers - 1:
            h = jnp.maximum(y, 0.1 * y)              # LeakyReLU(negative_slope=0.1)
        else:
            # Head: columns [0, num_outputs) are mu (tanh), last column is value.
            col = jax.lax.broadcasted_iota(jnp.int32, y.shape, 1)
            h = jnp.where(col < num_outputs, jnp.tanh(y), y)
    o_ref[...] = h                                   # one dense store, no padding


# --------------------------- parameter construction --------------------------
def init_linear_params(key, in_features, out_features):
    """Deterministic init mimicking PyTorch nn.Linear default U[-1/sqrt(in), 1/sqrt(in)]."""
    kw, kb = jax.random.split(key)
    bound = 1.0 / jnp.sqrt(jnp.float32(in_features))
    # Stored (in, out) — already transposed relative to PyTorch's (out, in).
    w = jax.random.uniform(kw, (in_features, out_features), jnp.float32, -bound, bound)
    b = jax.random.uniform(kb, (1, out_features), jnp.float32, -bound, bound)
    return w, b


def init_actor_critic_params(key, num_inputs, num_outputs, hidden_sizes, std=0.0):
    params = {"critic": [], "actor": []}
    dims = [num_inputs] + list(hidden_sizes)
    keys = jax.random.split(key, 2 * len(hidden_sizes) + 2)
    k = 0
    for i in range(len(hidden_sizes)):
        params["critic"].append(init_linear_params(keys[k], dims[i], dims[i + 1])); k += 1
    params["critic"].append(init_linear_params(keys[k], hidden_sizes[-1], 1)); k += 1
    for i in range(len(hidden_sizes)):
        params["actor"].append(init_linear_params(keys[k], dims[i], dims[i + 1])); k += 1
    params["actor"].append(init_linear_params(keys[k], hidden_sizes[-1], num_outputs)); k += 1
    params["log_std"] = jnp.ones((1, num_outputs), jnp.float32) * jnp.float32(std)
    return params


def _block_diag(a, c):
    ia, oa = a.shape
    ic, oc = c.shape
    top = jnp.concatenate([a, jnp.zeros((ia, oc), a.dtype)], axis=1)
    bot = jnp.concatenate([jnp.zeros((ic, oa), c.dtype), c], axis=1)
    return jnp.concatenate([top, bot], axis=0)


def fuse_actor_critic_params(params):
    """Stack actor + critic into one MLP (actor columns first). Done once, off the hot path."""
    actor, critic = params["actor"], params["critic"]
    n_hidden = len(actor) - 1
    fused = []
    # Layer 0: shared input -> concat output features.
    aw0, ab0 = actor[0]
    cw0, cb0 = critic[0]
    fused.append((jnp.concatenate([aw0, cw0], axis=1),
                  jnp.concatenate([ab0, cb0], axis=1)))
    # Middle hidden layers: block-diagonal (branches stay independent).
    for i in range(1, n_hidden):
        aw, ab = actor[i]
        cw, cb = critic[i]
        fused.append((_block_diag(aw, cw), jnp.concatenate([ab, cb], axis=1)))
    # Heads: block-diagonal -> output columns [mu (num_outputs) | value (1)].
    awh, abh = actor[-1]
    cwh, cbh = critic[-1]
    fused.append((_block_diag(awh, cwh), jnp.concatenate([abh, cbh], axis=1)))
    return fused


# ------------------------------ forward pass ---------------------------------
def _choose_block_b(B, max_block_b):
    # Keep grid length >= 2 when possible so dimension_semantics=("parallel",)
    # shards the batch across v7x's 2 TensorCores; otherwise maximize the tile
    # (each grid step costs ~0.35 us fixed overhead).
    half = _round_up(pl.cdiv(B, 2), 8)
    return max(8, min(int(max_block_b), half))


def actor_critic_forward(fused_params, log_std, x, *, max_block_b=1024):
    """Equivalent of ActorCritic.forward.

    Returns (mu, std, value); the Normal distribution is represented by its
    (mu, std) parameters.  One fused pallas_call for the whole forward.
    """
    B, num_inputs = x.shape
    num_outputs = int(log_std.shape[-1])
    out_width = num_outputs + 1                       # [mu | value]
    n_layers = len(fused_params)

    block_b = _choose_block_b(B, max_block_b)
    grid_b = pl.cdiv(B, block_b)
    padded_b = grid_b * block_b
    xp = x if padded_b == B else jnp.pad(x, ((0, padded_b - B), (0, 0)))

    flat_inputs = [xp]
    for (w, b) in fused_params:
        flat_inputs += [w, b]

    kernel = functools.partial(
        _fused_actor_critic_kernel, n_layers=n_layers, num_outputs=num_outputs
    )

    # Advisory cost estimate so XLA schedules this tiny custom call sensibly.
    matmul_flops = 2 * B * sum(int(w.shape[0]) * int(w.shape[1]) for (w, _) in fused_params)
    param_bytes = sum(int(w.size) * 4 + int(b.size) * 4 for (w, b) in fused_params)
    cost = pl.CostEstimate(
        flops=matmul_flops,
        transcendentals=B * out_width,                # tanh on the head tile
        bytes_accessed=B * num_inputs * 4 + param_bytes + B * out_width * 4,
    )

    # VMEM budget: lane-padded, double-buffered x/out tiles + resident params
    # + activation headroom.  Capped at 48 MiB (v7x has 64 MiB physical VMEM).
    def lane_padded(rows, cols):
        return rows * _round_up(max(cols, 128), 128) * 4
    max_width = max([num_inputs] + [int(w.shape[1]) for (w, _) in fused_params])
    x_tile = lane_padded(block_b, num_inputs)
    out_tile = lane_padded(block_b, out_width)
    act_tile = lane_padded(block_b, max_width)
    vmem_limit = int(min(48 << 20,
                         max(16 << 20,
                             2 * (x_tile + out_tile) + param_bytes + 4 * act_tile + (2 << 20))))

    const2 = lambda i: (0, 0)                         # weights/biases stay resident
    in_specs = [pl.BlockSpec((block_b, num_inputs), lambda i: (i, 0))]
    for (w, b) in fused_params:
        in_specs.append(pl.BlockSpec(tuple(w.shape), const2))
        in_specs.append(pl.BlockSpec(tuple(b.shape), const2))

    out = pl.pallas_call(
        kernel,
        out_shape=jax.ShapeDtypeStruct((padded_b, out_width), jnp.float32),
        grid=(grid_b,),
        in_specs=in_specs,
        out_specs=pl.BlockSpec((block_b, out_width), lambda i: (i, 0)),
        compiler_params=pltpu.CompilerParams(
            dimension_semantics=("parallel",),        # shards over v7x's 2 TCs; no-op v5e/v6e
            vmem_limit_bytes=vmem_limit,
        ),
        cost_estimate=cost,
    )(*flat_inputs)

    out = out[:B]
    mu = out[:, :num_outputs]
    value = out[:, num_outputs:]
    # std = exp(log_std) is batch-invariant: computed here, broadcast lazily.
    std = jnp.broadcast_to(jnp.exp(log_std), mu.shape)
    # TODO(synk): torch.distributions.Normal has no JAX/Pallas array equivalent;
    # we return the Normal's parameters (mu, std) instead of a distribution object.
    return mu, std, value


# ------------------------------ pure-JAX reference ---------------------------
def _reference_forward(params, x):
    hp = jax.lax.Precision.HIGHEST
    h = x
    for (w, b) in params["critic"][:-1]:
        y = jnp.dot(h, w, precision=hp) + b
        h = jnp.where(y >= 0, y, 0.1 * y)
    w, b = params["critic"][-1]
    value = jnp.dot(h, w, precision=hp) + b
    h = x
    for (w, b) in params["actor"][:-1]:
        y = jnp.dot(h, w, precision=hp) + b
        h = jnp.where(y >= 0, y, 0.1 * y)
    w, b = params["actor"][-1]
    mu = jnp.tanh(jnp.dot(h, w, precision=hp) + b)
    std = jnp.broadcast_to(jnp.exp(params["log_std"]), mu.shape)
    return mu, std, value


# ---------------------------------- main --------------------------------------
if __name__ == "__main__":
    key = jax.random.PRNGKey(0)
    k_params, k_x, k_x2 = jax.random.split(key, 3)

    # Small shapes consistent with the module's forward.
    B = 8
    num_inputs = 16
    hidden_sizes = [32, 32]
    num_outputs = 4
    std_init = 0.0

    params = init_actor_critic_params(
        k_params, num_inputs, num_outputs, hidden_sizes, std=std_init
    )
    fused = fuse_actor_critic_params(params)   # actor+critic stacked once, off the hot path
    log_std = params["log_std"]

    # --- small batch ---
    x = jax.random.normal(k_x, (B, num_inputs), jnp.float32)
    mu, std, value = actor_critic_forward(fused, log_std, x)
    jax.block_until_ready((mu, std, value))
    assert mu.shape == (B, num_outputs)
    assert std.shape == (B, num_outputs)
    assert value.shape == (B, 1)

    mu_r, std_r, value_r = _reference_forward(params, x)
    assert bool(jnp.allclose(mu, mu_r, atol=1e-4, rtol=1e-4))
    assert bool(jnp.allclose(std, std_r, atol=1e-4, rtol=1e-4))
    assert bool(jnp.allclose(value, value_r, atol=1e-4, rtol=1e-4))

    # --- larger ragged batch (exercises cdiv tiling + tail padding, grid >= 2) ---
    B2 = 300
    x2 = jax.random.normal(k_x2, (B2, num_inputs), jnp.float32)
    mu2, std2, value2 = actor_critic_forward(fused, log_std, x2)
    jax.block_until_ready((mu2, std2, value2))
    assert mu2.shape == (B2, num_outputs) and value2.shape == (B2, 1)
    mu2_r, std2_r, value2_r = _reference_forward(params, x2)
    assert bool(jnp.allclose(mu2, mu2_r, atol=1e-4, rtol=1e-4))
    assert bool(jnp.allclose(std2, std2_r, atol=1e-4, rtol=1e-4))
    assert bool(jnp.allclose(value2, value2_r, atol=1e-4, rtol=1e-4))

    print("KERNEL_OK")
</pallas_src>

<mosaic_0001>
module attributes {stable_mosaic.version = 11 : i64} {
  func.func @_fused_actor_critic_kernel(%arg0: i32, %arg1: memref<8x16xf32, #tpu.memory_space<vmem>>, %arg2: memref<16x64xf32, #tpu.memory_space<vmem>>, %arg3: memref<1x64xf32, #tpu.memory_space<vmem>>, %arg4: memref<64x64xf32, #tpu.memory_space<vmem>>, %arg5: memref<1x64xf32, #tpu.memory_space<vmem>>, %arg6: memref<64x5xf32, #tpu.memory_space<vmem>>, %arg7: memref<1x5xf32, #tpu.memory_space<vmem>>, %arg8: memref<8x5xf32, #tpu.memory_space<vmem>>) attributes {dimension_semantics = [#tpu.dimension_semantics<parallel>], iteration_bounds = array<i64: 1>, scalar_prefetch = 0 : i64, scratch_operands = 0 : i64, tpu.core_type = #tpu.core_type<tc>, window_params = [{transform_indices = @transform_0, window_bounds = array<i64: 8, 16>}, {pipeline_mode = #tpu.pipeline_mode<synchronous>, transform_indices = @transform_1, window_bounds = array<i64: 16, 64>}, {pipeline_mode = #tpu.pipeline_mode<synchronous>, transform_indices = @transform_2, window_bounds = array<i64: 1, 64>}, {pipeline_mode = #tpu.pipeline_mode<synchronous>, transform_indices = @transform_3, window_bounds = array<i64: 64, 64>}, {pipeline_mode = #tpu.pipeline_mode<synchronous>, transform_indices = @transform_4, window_bounds = array<i64: 1, 64>}, {pipeline_mode = #tpu.pipeline_mode<synchronous>, transform_indices = @transform_5, window_bounds = array<i64: 64, 5>}, {pipeline_mode = #tpu.pipeline_mode<synchronous>, transform_indices = @transform_6, window_bounds = array<i64: 1, 5>}, {transform_indices = @transform_7, window_bounds = array<i64: 8, 5>}]} {
    %c0 = arith.constant 0 : index
    %c0_0 = arith.constant 0 : index
    %0 = vector.load %arg1[%c0, %c0_0] : memref<8x16xf32, #tpu.memory_space<vmem>>, vector<8x16xf32>
    %c0_1 = arith.constant 0 : index
    %c0_2 = arith.constant 0 : index
    %1 = vector.load %arg2[%c0_1, %c0_2] : memref<16x64xf32, #tpu.memory_space<vmem>>, vector<16x64xf32>
    %c0_3 = arith.constant 0 : index
    %c0_4 = arith.constant 0 : index
    %2 = vector.load %arg3[%c0_3, %c0_4] : memref<1x64xf32, #tpu.memory_space<vmem>>, vector<1x64xf32>
    %cst = arith.constant dense<0.000000e+00> : vector<8x64xf32>
    %3 = tpu.matmul %0, %1, %cst {dimension_numbers = #tpu.dot_dimension_numbers<[1], [0], [0], [1], [0, 0, 1, 1], [], []>} : vector<8x16xf32>, vector<16x64xf32>, vector<8x64xf32> -> vector<8x64xf32>
    %4 = vector.broadcast %2 : vector<1x64xf32> to vector<8x64xf32>
    %5 = arith.addf %3, %4 : vector<8x64xf32>
    %cst_5 = arith.constant 1.000000e-01 : f32
    %6 = vector.broadcast %cst_5 : f32 to vector<8x64xf32>
    %7 = arith.mulf %6, %5 : vector<8x64xf32>
    %8 = arith.maximumf %5, %7 : vector<8x64xf32>
    %c0_6 = arith.constant 0 : index
    %c0_7 = arith.constant 0 : index
    %9 = vector.load %arg4[%c0_6, %c0_7] : memref<64x64xf32, #tpu.memory_space<vmem>>, vector<64x64xf32>
    %c0_8 = arith.constant 0 : index
    %c0_9 = arith.constant 0 : index
    %10 = vector.load %arg5[%c0_8, %c0_9] : memref<1x64xf32, #tpu.memory_space<vmem>>, vector<1x64xf32>
    %cst_10 = arith.constant dense<0.000000e+00> : vector<8x64xf32>
    %11 = tpu.matmul %8, %9, %cst_10 {dimension_numbers = #tpu.dot_dimension_numbers<[1], [0], [0], [1], [0, 0, 1, 1], [], []>} : vector<8x64xf32>, vector<64x64xf32>, vector<8x64xf32> -> vector<8x64xf32>
    %12 = vector.broadcast %10 : vector<1x64xf32> to vector<8x64xf32>
    %13 = arith.addf %11, %12 : vector<8x64xf32>
    %cst_11 = arith.constant 1.000000e-01 : f32
    %14 = vector.broadcast %cst_11 : f32 to vector<8x64xf32>
    %15 = arith.mulf %14, %13 : vector<8x64xf32>
    %16 = arith.maximumf %13, %15 : vector<8x64xf32>
    %c0_12 = arith.constant 0 : index
    %c0_13 = arith.constant 0 : index
    %17 = vector.load %arg6[%c0_12, %c0_13] : memref<64x5xf32, #tpu.memory_space<vmem>>, vector<64x5xf32>
    %c0_14 = arith.constant 0 : index
    %c0_15 = arith.constant 0 : index
    %18 = vector.load %arg7[%c0_14, %c0_15] : memref<1x5xf32, #tpu.memory_space<vmem>>, vector<1x5xf32>
    %cst_16 = arith.constant dense<0.000000e+00> : vector<8x5xf32>
    %19 = tpu.matmul %16, %17, %cst_16 {dimension_numbers = #tpu.dot_dimension_numbers<[1], [0], [0], [1], [0, 0, 1, 1], [], []>} : vector<8x64xf32>, vector<64x5xf32>, vector<8x5xf32> -> vector<8x5xf32>
    %20 = vector.broadcast %18 : vector<1x5xf32> to vector<8x5xf32>
    %21 = arith.addf %19, %20 : vector<8x5xf32>
    %22 = tpu.iota {dimensions = array<i32: 1>} : vector<8x5xi32>
    %c4_i32 = arith.constant 4 : i32
    %23 = vector.broadcast %c4_i32 : i32 to vector<8x5xi32>
    %24 = arith.cmpi slt, %22, %23 : vector<8x5xi32>
    %25 = math.tanh %21 : vector<8x5xf32>
    %26 = arith.select %24, %25, %21 : vector<8x5xi1>, vector<8x5xf32>
    %c0_17 = arith.constant 0 : index
    %c0_18 = arith.constant 0 : index
    %27 = vector.load %arg8[%c0_17, %c0_18] : memref<8x5xf32, #tpu.memory_space<vmem>>, vector<8x5xf32>
    tpu.vector_store %arg8[%c0_17, %c0_18], %26 {strides = array<i32>} : memref<8x5xf32, #tpu.memory_space<vmem>>, vector<8x5xf32>,
    return
  }
  func.func @transform_0(%arg0: i32) -> (i32, i32) {
    %c0_i32 = arith.constant 0 : i32
    %c0_i32_0 = arith.constant 0 : i32
    return %arg0, %c0_i32 : i32, i32
  }
  func.func @transform_1(%arg0: i32) -> (i32, i32) {
    %c0_i32 = arith.constant 0 : i32
    %c0_i32_0 = arith.constant 0 : i32
    %c0_i32_1 = arith.constant 0 : i32
    return %c0_i32, %c0_i32_0 : i32, i32
  }
  func.func @transform_2(%arg0: i32) -> (i32, i32) {
    %c0_i32 = arith.constant 0 : i32
    %c0_i32_0 = arith.constant 0 : i32
    %c0_i32_1 = arith.constant 0 : i32
    return %c0_i32, %c0_i32_0 : i32, i32
  }
  func.func @transform_3(%arg0: i32) -> (i32, i32) {
    %c0_i32 = arith.constant 0 : i32
    %c0_i32_0 = arith.constant 0 : i32
    %c0_i32_1 = arith.constant 0 : i32
    return %c0_i32, %c0_i32_0 : i32, i32
  }
  func.func @transform_4(%arg0: i32) -> (i32, i32) {
    %c0_i32 = arith.constant 0 : i32
    %c0_i32_0 = arith.constant 0 : i32
    %c0_i32_1 = arith.constant 0 : i32
    return %c0_i32, %c0_i32_0 : i32, i32
  }
  func.func @transform_5(%arg0: i32) -> (i32, i32) {
    %c0_i32 = arith.constant 0 : i32
    %c0_i32_0 = arith.constant 0 : i32
    %c0_i32_1 = arith.constant 0 : i32
    return %c0_i32, %c0_i32_0 : i32, i32
  }
  func.func @transform_6(%arg0: i32) -> (i32, i32) {
    %c0_i32 = arith.constant 0 : i32
    %c0_i32_0 = arith.constant 0 : i32
    %c0_i32_1 = arith.constant 0 : i32
    return %c0_i32, %c0_i32_0 : i32, i32
  }
  func.func @transform_7(%arg0: i32) -> (i32, i32) {
    %c0_i32 = arith.constant 0 : i32
    %c0_i32_0 = arith.constant 0 : i32
    return %arg0, %c0_i32 : i32, i32
  }
}

</mosaic_0001>

<llo_original>
// kernel: tpu_custom_call.1
$region0: #{tpu_custom_call.1}
  #allocation0 [shape = 'u32[]', space=smem, size = 0x4, offset = 0x4, fixed_abs, tag = 'smem constant byte address 0x4 - core index']
  #allocation1 [shape = 'u32[144,128]{1,0:T(1,128)}', space=vmem, size = 0x12000, scoped, tag = 'internal scratch']
  %s0 = inlined_call_operand.hbm [shape: f32[8,16], index: 0, kind: input, shape index: {}]
  %s1 = inlined_call_operand.vmem [shape: f32[16,64], index: 1, kind: input, shape index: {}]
  %s2 = inlined_call_operand.vmem [shape: f32[1,64], index: 2, kind: input, shape index: {}]
  %s3 = inlined_call_operand.vmem [shape: f32[64,64], index: 3, kind: input, shape index: {}]
  %s4 = inlined_call_operand.vmem [shape: f32[1,64], index: 4, kind: input, shape index: {}]
  %s5 = inlined_call_operand.vmem [shape: f32[64,5], index: 5, kind: input, shape index: {}]
  %s6 = inlined_call_operand.vmem [shape: f32[1,5], index: 6, kind: input, shape index: {}]
  %s7 = inlined_call_operand.hbm [shape: f32[8,5], index: 7, kind: output, shape index: {}]
  %s8 = sld [smem:[#allocation0]]
  $region42: #{tpu_custom_call.1} parent=0
    _
  %s10 = ssub.s32 1, %s8
  %s11 = scalar_select 0, %s10, %s8
  $region1: #{tpu_custom_call.1} parent=0
    #allocation2 [shape = 'u8[4096]{0}', space=vmem, size = 0x1000, scoped, tag = 'input window, operand 0, single buffered']
    #allocation3 [shape = 's32[1]{0}', space=sflag, size = 0x4, scoped, tag = 'scoped memory for tpu_custom_call.1']
    #allocation4 [shape = 's32[1]{0}', space=sflag, size = 0x4, scoped, tag = 'scoped memory for tpu_custom_call.1']
    #allocation5 [shape = 'u8[4096]{0}', space=vmem, size = 0x1000, scoped, tag = 'output window, operand 0, single buffered']
    %12 = vsyncpa [#allocation3], 0
    %13 = vsyncpa [#allocation4], 0
    // Predicated region
    $region2: #{tpu_custom_call.1} parent=1 // pred_check
      _
    $region3: #{tpu_custom_call.1} parent=1 // pred_check_branch
      %15 = sbr.rel (0) target = $region5
    $region4: #{tpu_custom_call.1} parent=1 // pred_region
      %s17 = ssub.s32 128, 128
      %18 = vsyncadd [#allocation3], %s17
      %s20 = sshll.u32 [#allocation2], 4
      %s21 = int_to_ptr.vmem [resolvable:$true] %s20
      %23 = dma.hbm_to_vmem [thread:$0]  %s0, 128, %s21, [#allocation3]
    $region5: #{tpu_custom_call.1} parent=1 // pred_fallthru
      _
    // Predicated region
    $region6: #{tpu_custom_call.1} parent=1 // pred_check
      _
    $region7: #{tpu_custom_call.1} parent=1 // pred_check_branch
      %25 = sbr.rel (0) target = $region9
    $region8: #{tpu_custom_call.1} parent=1 // pred_region
      _
    $region9: #{tpu_custom_call.1} parent=1 // pred_fallthru
      _
    // Predicated region
    $region10: #{tpu_custom_call.1} parent=1 // pred_check
      _
    $region11: #{tpu_custom_call.1} parent=1 // pred_check_branch
      %27 = sbr.rel (0) target = $region13
    $region12: #{tpu_custom_call.1} parent=1 // pred_region
      _
    $region13: #{tpu_custom_call.1} parent=1 // pred_fallthru
      _
    // Predicated region
    $region14: #{tpu_custom_call.1} parent=1 // pred_check
      _
    $region15: #{tpu_custom_call.1} parent=1 // pred_check_branch
      %29 = sbr.rel (0) target = $region17
    $region16: #{tpu_custom_call.1} parent=1 // pred_region
      _
    $region17: #{tpu_custom_call.1} parent=1 // pred_fallthru
      _
    // Predicated region
    $region18: #{tpu_custom_call.1} parent=1 // pred_check
      _
    $region19: #{tpu_custom_call.1} parent=1 // pred_check_branch
      %31 = sbr.rel (0) target = $region21
    $region20: #{tpu_custom_call.1} parent=1 // pred_region
      _
    $region21: #{tpu_custom_call.1} parent=1 // pred_fallthru
      _
    // Predicated region
    $region22: #{tpu_custom_call.1} parent=1 // pred_check
      _
    $region23: #{tpu_custom_call.1} parent=1 // pred_check_branch
      %33 = sbr.rel (0) target = $region25
    $region24: #{tpu_custom_call.1} parent=1 // pred_region
      _
    $region25: #{tpu_custom_call.1} parent=1 // pred_fallthru
      _
    // Predicated region
    $region26: #{tpu_custom_call.1} parent=1 // pred_check
      _
    $region27: #{tpu_custom_call.1} parent=1 // pred_check_branch
      %35 = sbr.rel (0) target = $region29
    $region28: #{tpu_custom_call.1} parent=1 // pred_region
      _
    $region29: #{tpu_custom_call.1} parent=1 // pred_fallthru
      _
    // Predicated region
    $region30: #{tpu_custom_call.1} parent=1 // pred_check
      _
    $region31: #{tpu_custom_call.1} parent=1 // pred_check_branch
      %37 = sbr.rel (0) target = $region33
    $region32: #{tpu_custom_call.1} parent=1 // pred_region
      %38 = dma.done [#allocation3], 128
    $region33: #{tpu_custom_call.1} parent=1 // pred_fallthru
      _
    %v39 = vld [vmem:[#allocation2] sm:$0xff]
    %v40 = vld [vmem:[%s1] sm:$0xff]
    %v41 = vld [vmem:[%s1 + $0x8] sm:$0xff]
    %v42 = vld [vmem:[%s2] sm:$0x1]
    %v44 = vlaneseq
    %v45 = vshrl.u32 %v44, 7
    %v46 = vsub.s32 0, %v45
    %v47 = vrot.slane %v42, %v46
    %vm49 = vcmask 130048
    %v51 = vsel %vm49, %v39, 0
    %53 = vmatprep.subr.mxu0 0.0
    %54 = vmatpush1.msra.mxu0 %v40
    %55 = vmatprep.subr.mxu0 0.0
    %56 = vmatpush1.msra.mxu0 %v41
    %57 = vmatprep.subr.mxu0 0.0
    %58 = vmatpush1.msra.mxu0 0.0
    %59 = vmatprep.subr.mxu0 0.0
    %60 = vmatpush1.msra.mxu0 0.0
    %61 = vmatprep.subr.mxu0 0.0
    %62 = vmatpush1.msra.mxu0 0.0
    %63 = vmatprep.subr.mxu0 0.0
    %64 = vmatpush1.msra.mxu0 0.0
    %65 = vmatprep.subr.mxu0 0.0
    %66 = vmatpush1.msra.mxu0 0.0
    %67 = vmatprep.subr.mxu0 0.0
    %68 = vmatpush1.msra.mxu0 0.0
    %69 = vmatprep.subr.mxu0 0.0
    %70 = vmatpush1.msra.mxu0 0.0
    %71 = vmatprep.subr.mxu0 0.0
    %72 = vmatpush1.msra.mxu0 0.0
    %73 = vmatprep.subr.mxu0 0.0
    %74 = vmatpush1.msra.mxu0 0.0
    %75 = vmatprep.subr.mxu0 0.0
    %76 = vmatpush1.msra.mxu0 0.0
    %77 = vmatprep.subr.mxu0 0.0
    %78 = vmatpush1.msra.mxu0 0.0
    %79 = vmatprep.subr.mxu0 0.0
    %80 = vmatpush1.msra.mxu0 0.0
    %81 = vmatprep.subr.mxu0 0.0
    %82 = vmatpush1.msra.mxu0 0.0
    %83 = vmatprep.subr.mxu0 0.0
    %84 = vmatpush1.msra.mxu0 0.0
    %85 = vmatprep.subr.mxu0 0.0
    %86 = vmatpush1.msra.mxu0 0.0
    %87 = vmatprep.subr.mxu0 0.0
    %88 = vmatpush1.msra.mxu0 0.0
    %89 = vmatprep.subr.mxu0 0.0
    %90 = vmatpush1.msra.mxu0 0.0
    %91 = vmatprep.subr.mxu0 0.0
    %92 = vmatpush1.msra.mxu0 0.0
    %93 = vmatprep.subr.mxu0 0.0
    %94 = vmatpush1.msra.mxu0 0.0
    %95 = vmatprep.subr.mxu0 0.0
    %96 = vmatpush1.msra.mxu0 0.0
    %97 = vmatprep.subr.mxu0 0.0
    %98 = vmatpush1.msra.mxu0 0.0
    %99 = vmatprep.subr.mxu0 0.0
    %100 = vmatpush1.msra.mxu0 0.0
    %101 = vmatprep.subr.mxu0 0.0
    %102 = vmatpush1.msra.mxu0 0.0
    %103 = vmatprep.subr.mxu0 0.0
    %104 = vmatpush1.msra.mxu0 0.0
    %105 = vmatprep.subr.mxu0 0.0
    %106 = vmatpush1.msra.mxu0 0.0
    %107 = vmatprep.subr.mxu0 0.0
    %108 = vmatpush1.msra.mxu0 0.0
    %109 = vmatprep.subr.mxu0 0.0
    %110 = vmatpush1.msra.mxu0 0.0
    %111 = vmatprep.subr.mxu0 0.0
    %112 = vmatpush1.msra.mxu0 0.0
    %113 = vmatprep.subr.mxu0 0.0
    %114 = vmatpush1.msra.mxu0 0.0
    %115 = vmatprep.subr.mxu0 0.0
    %116 = vmatpush1.msra.mxu0 0.0
    %117 = vmatprep.mubr.f32.mxu0 0.0
    %118 = vmatmul.mubr.f32.gmra.mrb[0].mxu0 %v51
    %v119 = vpop.f32.mrb[0].mxu0
    %v120 = vadd.f32 %v47, %v119
    %v121 = vpop.f32.mrb[0].mxu0
    %122 = vdwg.mxu0
    %v123 = vmul.f32 %v120, 0.1
    %v124 = vmax.f32 %v120, %v123
    %v125 = vld [vmem:[%s3] sm:$0xff]
    %v126 = vld [vmem:[%s3 + $0x8] sm:$0xff]
    %v127 = vld [vmem:[%s3 + $0x10] sm:$0xff]
    %v128 = vld [vmem:[%s3 + $0x18] sm:$0xff]
    %v129 = vld [vmem:[%s3 + $0x20] sm:$0xff]
    %v130 = vld [vmem:[%s3 + $0x28] sm:$0xff]
    %v131 = vld [vmem:[%s3 + $0x30] sm:$0xff]
    %v132 = vld [vmem:[%s3 + $0x38] sm:$0xff]
    %v133 = vld [vmem:[%s4] sm:$0x1]
    %v135 = vlaneseq
    %v136 = vshrl.u32 %v135, 7
    %v137 = vsub.s32 0, %v136
    %v138 = vrot.slane %v133, %v137
    %vm140 = vcmask 523264
    %v142 = vsel %vm140, %v124, 0
    %144 = vmatprep.subr.mxu0 0.0
    %145 = vmatpush1.msra.mxu0 %v125
    %146 = vmatprep.subr.mxu0 0.0
    %147 = vmatpush1.msra.mxu0 %v126
    %148 = vmatprep.subr.mxu0 0.0
    %149 = vmatpush1.msra.mxu0 %v127
    %150 = vmatprep.subr.mxu0 0.0
    %151 = vmatpush1.msra.mxu0 %v128
    %152 = vmatprep.subr.mxu0 0.0
    %153 = vmatpush1.msra.mxu0 %v129
    %154 = vmatprep.subr.mxu0 0.0
    %155 = vmatpush1.msra.mxu0 %v130
    %156 = vmatprep.subr.mxu0 0.0
    %157 = vmatpush1.msra.mxu0 %v131
    %158 = vmatprep.subr.mxu0 0.0
    %159 = vmatpush1.msra.mxu0 %v132
    %160 = vmatprep.subr.mxu0 0.0
    %161 = vmatpush1.msra.mxu0 0.0
    %162 = vmatprep.subr.mxu0 0.0
    %163 = vmatpush1.msra.mxu0 0.0
    %164 = vmatprep.subr.mxu0 0.0
    %165 = vmatpush1.msra.mxu0 0.0
    %166 = vmatprep.subr.mxu0 0.0
    %167 = vmatpush1.msra.mxu0 0.0
    %168 = vmatprep.subr.mxu0 0.0
    %169 = vmatpush1.msra.mxu0 0.0
    %170 = vmatprep.subr.mxu0 0.0
    %171 = vmatpush1.msra.mxu0 0.0
    %172 = vmatprep.subr.mxu0 0.0
    %173 = vmatpush1.msra.mxu0 0.0
    %174 = vmatprep.subr.mxu0 0.0
    %175 = vmatpush1.msra.mxu0 0.0
    %176 = vmatprep.subr.mxu0 0.0
    %177 = vmatpush1.msra.mxu0 0.0
    %178 = vmatprep.subr.mxu0 0.0
    %179 = vmatpush1.msra.mxu0 0.0
    %180 = vmatprep.subr.mxu0 0.0
    %181 = vmatpush1.msra.mxu0 0.0
    %182 = vmatprep.subr.mxu0 0.0
    %183 = vmatpush1.msra.mxu0 0.0
    %184 = vmatprep.subr.mxu0 0.0
    %185 = vmatpush1.msra.mxu0 0.0
    %186 = vmatprep.subr.mxu0 0.0
    %187 = vmatpush1.msra.mxu0 0.0
    %188 = vmatprep.subr.mxu0 0.0
    %189 = vmatpush1.msra.mxu0 0.0
    %190 = vmatprep.subr.mxu0 0.0
    %191 = vmatpush1.msra.mxu0 0.0
    %192 = vmatprep.subr.mxu0 0.0
    %193 = vmatpush1.msra.mxu0 0.0
    %194 = vmatprep.subr.mxu0 0.0
    %195 = vmatpush1.msra.mxu0 0.0
    %196 = vmatprep.subr.mxu0 0.0
    %197 = vmatpush1.msra.mxu0 0.0
    %198 = vmatprep.subr.mxu0 0.0
    %199 = vmatpush1.msra.mxu0 0.0
    %200 = vmatprep.subr.mxu0 0.0
    %201 = vmatpush1.msra.mxu0 0.0
    %202 = vmatprep.subr.mxu0 0.0
    %203 = vmatpush1.msra.mxu0 0.0
    %204 = vmatprep.subr.mxu0 0.0
    %205 = vmatpush1.msra.mxu0 0.0
    %206 = vmatprep.subr.mxu0 0.0
    %207 = vmatpush1.msra.mxu0 0.0
    %208 = vmatprep.mubr.f32.mxu0 0.0
    %209 = vmatmul.mubr.f32.gmra.mrb[0].mxu0 %v142
    %v210 = vpop.f32.mrb[0].mxu0
    %v211 = vadd.f32 %v138, %v210
    %v212 = vpop.f32.mrb[0].mxu0
    %213 = vdwg.mxu0
    %v214 = vmul.f32 %v211, 0.1
    %v215 = vmax.f32 %v211, %v214
    %v216 = vld [vmem:[%s5] sm:$0xff]
    %v217 = vld [vmem:[%s5 + $0x8] sm:$0xff]
    %v218 = vld [vmem:[%s5 + $0x10] sm:$0xff]
    %v219 = vld [vmem:[%s5 + $0x18] sm:$0xff]
    %v220 = vld [vmem:[%s5 + $0x20] sm:$0xff]
    %v221 = vld [vmem:[%s5 + $0x28] sm:$0xff]
    %v222 = vld [vmem:[%s5 + $0x30] sm:$0xff]
    %v223 = vld [vmem:[%s5 + $0x38] sm:$0xff]
    %v224 = vld [vmem:[%s6] sm:$0x1]
    %v226 = vlaneseq
    %v227 = vshrl.u32 %v226, 7
    %v228 = vsub.s32 0, %v227
    %v229 = vrot.slane %v224, %v228
    %v232 = vsel %vm140, %v215, 0
    %234 = vmatprep.subr.mxu0 0.0
    %235 = vmatpush1.msra.mxu0 %v216
    %236 = vmatprep.subr.mxu0 0.0
    %237 = vmatpush1.msra.mxu0 %v217
    %238 = vmatprep.subr.mxu0 0.0
    %239 = vmatpush1.msra.mxu0 %v218
    %240 = vmatprep.subr.mxu0 0.0
    %241 = vmatpush1.msra.mxu0 %v219
    %242 = vmatprep.subr.mxu0 0.0
    %243 = vmatpush1.msra.mxu0 %v220
    %244 = vmatprep.subr.mxu0 0.0
    %245 = vmatpush1.msra.mxu0 %v221
    %246 = vmatprep.subr.mxu0 0.0
    %247 = vmatpush1.msra.mxu0 %v222
    %248 = vmatprep.subr.mxu0 0.0
    %249 = vmatpush1.msra.mxu0 %v223
    %250 = vmatprep.subr.mxu0 0.0
    %251 = vmatpush1.msra.mxu0 0.0
    %252 = vmatprep.subr.mxu0 0.0
    %253 = vmatpush1.msra.mxu0 0.0
    %254 = vmatprep.subr.mxu0 0.0
    %255 = vmatpush1.msra.mxu0 0.0
    %256 = vmatprep.subr.mxu0 0.0
    %257 = vmatpush1.msra.mxu0 0.0
    %258 = vmatprep.subr.mxu0 0.0
    %259 = vmatpush1.msra.mxu0 0.0
    %260 = vmatprep.subr.mxu0 0.0
    %261 = vmatpush1.msra.mxu0 0.0
    %262 = vmatprep.subr.mxu0 0.0
    %263 = vmatpush1.msra.mxu0 0.0
    %264 = vmatprep.subr.mxu0 0.0
    %265 = vmatpush1.msra.mxu0 0.0
    %266 = vmatprep.subr.mxu0 0.0
    %267 = vmatpush1.msra.mxu0 0.0
    %268 = vmatprep.subr.mxu0 0.0
    %269 = vmatpush1.msra.mxu0 0.0
    %270 = vmatprep.subr.mxu0 0.0
    %271 = vmatpush1.msra.mxu0 0.0
    %272 = vmatprep.subr.mxu0 0.0
    %273 = vmatpush1.msra.mxu0 0.0
    %274 = vmatprep.subr.mxu0 0.0
    %275 = vmatpush1.msra.mxu0 0.0
    %276 = vmatprep.subr.mxu0 0.0
    %277 = vmatpush1.msra.mxu0 0.0
    %278 = vmatprep.subr.mxu0 0.0
    %279 = vmatpush1.msra.mxu0 0.0
    %280 = vmatprep.subr.mxu0 0.0
    %281 = vmatpush1.msra.mxu0 0.0
    %282 = vmatprep.subr.mxu0 0.0
    %283 = vmatpush1.msra.mxu0 0.0
    %284 = vmatprep.subr.mxu0 0.0
    %285 = vmatpush1.msra.mxu0 0.0
    %286 = vmatprep.subr.mxu0 0.0
    %287 = vmatpush1.msra.mxu0 0.0
    %288 = vmatprep.subr.mxu0 0.0
    %289 = vmatpush1.msra.mxu0 0.0
    %290 = vmatprep.subr.mxu0 0.0
    %291 = vmatpush1.msra.mxu0 0.0
    %292 = vmatprep.subr.mxu0 0.0
    %293 = vmatpush1.msra.mxu0 0.0
    %294 = vmatprep.subr.mxu0 0.0
    %295 = vmatpush1.msra.mxu0 0.0
    %296 = vmatprep.subr.mxu0 0.0
    %297 = vmatpush1.msra.mxu0 0.0
    %298 = vmatprep.mubr.f32.mxu0 0.0
    %299 = vmatmul.mubr.f32.gmra.mrb[0].mxu0 %v232
    %v300 = vpop.f32.mrb[0].mxu0
    %v301 = vadd.f32 %v229, %v300
    %v302 = vpop.f32.mrb[0].mxu0
    %303 = vdwg.mxu0
    %v304 = vlaneseq
    %v305 = vand.u32 %v304, 127
    %vm306 = vcmp.lt.s32.totalorder %v305, 4
    %v307 = vtanh.pop %v301
    %v308 = vsel %vm306, %v307, %v301
    %vm309 = vcmask 39936
    %310 = vst.msk [vmem:[#allocation5] sm:$0xff] %vm309, %v308
    // Predicated region
    $region34: #{tpu_custom_call.1} parent=1 // pred_check
      _
    $region35: #{tpu_custom_call.1} parent=1 // pred_check_branch
      %312 = sbr.rel (0) target = $region37
    $region36: #{tpu_custom_call.1} parent=1 // pred_region
      %s314 = ssub.s32 128, 128
      %315 = vsyncadd [#allocation4], %s314
      %s317 = sshll.u32 [#allocation5], 4
      %s318 = int_to_ptr.vmem [resolvable:$true] %s317
      %320 = dma.vmem_to_hbm [thread:$0]  %s318, 128, %s7, [#allocation4]
    $region37: #{tpu_custom_call.1} parent=1 // pred_fallthru
      _
    // Predicated region
    $region38: #{tpu_custom_call.1} parent=1 // pred_check
      _
    $region39: #{tpu_custom_call.1} parent=1 // pred_check_branch
      %322 = sbr.rel (0) target = $region41
    $region40: #{tpu_custom_call.1} parent=1 // pred_region
      %323 = dma.done [#allocation4], 128
    $region41: #{tpu_custom_call.1} parent=1 // pred_fallthru
      _
    %324 = vsyncpa [#allocation3], 1
    %325 = vsyncpa [#allocation4], 1

</llo_original>
